<compile_context>
chip_gen: v7x
topology: tpu7x:2x2x1
jax: 0.10.0
libtpu: 0.0.40
codegen_flags: <defaults>
</compile_context>

<pallas_src>
import jax
import jax.numpy as jnp
from jax.experimental import pallas as pl
from jax.experimental.pallas import tpu as pltpu

_LANES = 128
_MAX_TILE_ROWS = 4096  # 4096 * 128 * 4B = 2 MiB per f32 buffer


def _cdiv(a: int, b: int) -> int:
    return -(-a // b)


def _round_up(x: int, m: int) -> int:
    return ((x + m - 1) // m) * m


def _normalize_kernel(scale_ref, bias_ref, img_ref, out_ref):
    # scale_ref / bias_ref: (C,) float32 in SMEM.
    # img_ref / out_ref: (1, 1, tile_rows, 128) VMEM tiles for the current
    # (batch, channel, spatial-tile) grid point.
    c = pl.program_id(1)
    s = scale_ref[c]
    b = bias_ref[c]
    x = img_ref[...].astype(jnp.float32)
    out_ref[...] = (x * s + b).astype(out_ref.dtype)


def normalization(img: jax.Array, mean: jax.Array, std: jax.Array) -> jax.Array:
    """img: (N, C, H, W); mean, std: (C,). Returns (img - mean[c]) / std[c]."""
    N, C, H, W = img.shape
    HW = H * W

    mean = mean.astype(jnp.float32)
    std = std.astype(jnp.float32)
    scale = 1.0 / std          # (C,) — done once, outside the kernel
    bias = -mean * scale       # (C,)

    # Lane-dense spatial tiling: flatten H*W into rows of 128 lanes.
    rows_total = _cdiv(HW, _LANES)
    if rows_total <= _MAX_TILE_ROWS:
        # Single tile per (n, c): block equals the full (rows, 128) slab, so no
        # sublane rounding is required and no pad copy when HW % 128 == 0.
        n_spatial = 1
        tile_rows = rows_total
    else:
        # Split into balanced tiles (multiple of 8 sublanes, <= ~2 MiB each).
        n_spatial = _cdiv(rows_total, _MAX_TILE_ROWS)
        tile_rows = _round_up(_cdiv(rows_total, n_spatial), 8)
    rows_pad = tile_rows * n_spatial
    hw_pad = rows_pad * _LANES

    img_flat = img.reshape(N, C, HW)
    if hw_pad != HW:
        img_flat = jnp.pad(img_flat, ((0, 0), (0, 0), (0, hw_pad - HW)))
    img_tiled = img_flat.reshape(N, C, rows_pad, _LANES)

    itemsize = jnp.dtype(img.dtype).itemsize
    out = pl.pallas_call(
        _normalize_kernel,
        out_shape=jax.ShapeDtypeStruct((N, C, rows_pad, _LANES), img.dtype),
        grid=(N, C, n_spatial),
        in_specs=[
            pl.BlockSpec(memory_space=pltpu.MemorySpace.SMEM),  # scale (C,)
            pl.BlockSpec(memory_space=pltpu.MemorySpace.SMEM),  # bias  (C,)
            pl.BlockSpec((1, 1, tile_rows, _LANES), lambda n, c, t: (n, c, t, 0)),
        ],
        out_specs=pl.BlockSpec(
            (1, 1, tile_rows, _LANES), lambda n, c, t: (n, c, t, 0)
        ),
        compiler_params=pltpu.CompilerParams(
            dimension_semantics=("parallel", "parallel", "parallel"),
            vmem_limit_bytes=32 * 1024 * 1024,
        ),
        cost_estimate=pl.CostEstimate(
            flops=2 * N * C * HW,
            transcendentals=0,
            bytes_accessed=2 * N * C * HW * itemsize,
        ),
    )(scale, bias, img_tiled)

    if hw_pad != HW:
        out = out.reshape(N, C, hw_pad)[:, :, :HW]
    return out.reshape(N, C, H, W)


if __name__ == "__main__":
    key = jax.random.PRNGKey(0)
    N, C, H, W = 2, 3, 16, 16  # 3 channels to match the ImageNet mean/std

    img = jax.random.uniform(key, (N, C, H, W), dtype=jnp.float32)
    mean = jnp.array([0.485, 0.456, 0.406], dtype=jnp.float32)
    std = jnp.array([0.229, 0.224, 0.225], dtype=jnp.float32)

    out = normalization(img, mean, std)
    out = jax.block_until_ready(out)

    # reference check (plain JAX, same semantics as the PyTorch module)
    ref = (img - mean.reshape(1, C, 1, 1)) / std.reshape(1, C, 1, 1)
    assert out.shape == ref.shape, "shape mismatch vs reference"
    assert jnp.allclose(out, ref, atol=1e-5, rtol=1e-5), "mismatch vs reference"

    print("KERNEL_OK")
</pallas_src>

<mosaic_0001>
module attributes {stable_mosaic.version = 11 : i64} {
  func.func @_normalize_kernel(%arg0: i32, %arg1: i32, %arg2: i32, %arg3: memref<3xf32, #tpu.memory_space<smem>>, %arg4: memref<3xf32, #tpu.memory_space<smem>>, %arg5: memref<1x1x2x128xf32, #tpu.memory_space<vmem>>, %arg6: memref<1x1x2x128xf32, #tpu.memory_space<vmem>>) attributes {dimension_semantics = [#tpu.dimension_semantics<parallel>, #tpu.dimension_semantics<parallel>, #tpu.dimension_semantics<parallel>], iteration_bounds = array<i64: 2, 3, 1>, scalar_prefetch = 0 : i64, scratch_operands = 0 : i64, tpu.core_type = #tpu.core_type<tc>, window_params = [{transform_indices = @transform_0, window_bounds = array<i64: 3>}, {transform_indices = @transform_1, window_bounds = array<i64: 3>}, {transform_indices = @transform_2, window_bounds = array<i64: 1, 1, 2, 128>}, {transform_indices = @transform_3, window_bounds = array<i64: 1, 1, 2, 128>}]} {
    %0 = arith.index_cast %arg1 : i32 to index
    %1 = memref.load %arg3[%0] : memref<3xf32, #tpu.memory_space<smem>>
    %2 = arith.index_cast %arg1 : i32 to index
    %3 = memref.load %arg4[%2] : memref<3xf32, #tpu.memory_space<smem>>
    %c0 = arith.constant 0 : index
    %c0_0 = arith.constant 0 : index
    %c0_1 = arith.constant 0 : index
    %c0_2 = arith.constant 0 : index
    %4 = vector.load %arg5[%c0, %c0_0, %c0_1, %c0_2] : memref<1x1x2x128xf32, #tpu.memory_space<vmem>>, vector<1x1x2x128xf32>
    %5 = vector.broadcast %1 : f32 to vector<1x1x2x128xf32>
    %6 = arith.mulf %4, %5 : vector<1x1x2x128xf32>
    %7 = vector.broadcast %3 : f32 to vector<1x1x2x128xf32>
    %8 = arith.addf %6, %7 : vector<1x1x2x128xf32>
    %c0_3 = arith.constant 0 : index
    %c0_4 = arith.constant 0 : index
    %c0_5 = arith.constant 0 : index
    %c0_6 = arith.constant 0 : index
    %9 = vector.load %arg6[%c0_3, %c0_4, %c0_5, %c0_6] : memref<1x1x2x128xf32, #tpu.memory_space<vmem>>, vector<1x1x2x128xf32>
    tpu.vector_store %arg6[%c0_3, %c0_4, %c0_5, %c0_6], %8 {strides = array<i32>} : memref<1x1x2x128xf32, #tpu.memory_space<vmem>>, vector<1x1x2x128xf32>,
    return
  }
  func.func @transform_0(%arg0: i32, %arg1: i32, %arg2: i32) -> i32 {
    %c0_i32 = arith.constant 0 : i32
    %c0_i32_0 = arith.constant 0 : i32
    return %c0_i32 : i32
  }
  func.func @transform_1(%arg0: i32, %arg1: i32, %arg2: i32) -> i32 {
    %c0_i32 = arith.constant 0 : i32
    %c0_i32_0 = arith.constant 0 : i32
    return %c0_i32 : i32
  }
  func.func @transform_2(%arg0: i32, %arg1: i32, %arg2: i32) -> (i32, i32, i32, i32) {
    %c0_i32 = arith.constant 0 : i32
    %c0_i32_0 = arith.constant 0 : i32
    return %arg0, %arg1, %arg2, %c0_i32 : i32, i32, i32, i32
  }
  func.func @transform_3(%arg0: i32, %arg1: i32, %arg2: i32) -> (i32, i32, i32, i32) {
    %c0_i32 = arith.constant 0 : i32
    %c0_i32_0 = arith.constant 0 : i32
    return %arg0, %arg1, %arg2, %c0_i32 : i32, i32, i32, i32
  }
}

</mosaic_0001>

<llo_original>
// kernel: tpu_custom_call.1
$region0: #{tpu_custom_call.1}
  #allocation0 [shape = 'u32[]', space=smem, size = 0x4, offset = 0x4, fixed_abs, tag = 'smem constant byte address 0x4 - core index']
  #allocation1 [shape = 'u32[144,128]{1,0:T(1,128)}', space=vmem, size = 0x12000, scoped, tag = 'internal scratch']
  %s0 = inlined_call_operand.hbm [shape: f32[3], index: 0, kind: input, shape index: {}]
  %s1 = inlined_call_operand.vmem [shape: f32[3], index: 1, kind: input, shape index: {}]
  %s2 = inlined_call_operand.hbm [shape: f32[2,3,2,128], index: 2, kind: input, shape index: {}]
  %s3 = inlined_call_operand.hbm [shape: f32[2,3,2,128], index: 3, kind: output, shape index: {}]
  %s4 = sld [smem:[#allocation0]]
  $region57: #{tpu_custom_call.1} parent=0
    _
  %s6 = ssub.s32 1, %s4
  %s7 = scalar_select 0, %s6, %s4
  $region1: #{tpu_custom_call.1} parent=0
    #allocation2 [shape = 'u8[512]{0}', space=smem, size = 0x200, scoped, tag = 'input window, operand 0, single buffered']
    #allocation3 [shape = 's32[2]{0}', space=sflag, size = 0x8, scoped, tag = 'scoped memory for tpu_custom_call.1']
    #allocation4 [shape = 's32[2]{0}', space=sflag, size = 0x8, scoped, tag = 'scoped memory for tpu_custom_call.1']
    #allocation5 [shape = 's32[2]{0}', space=sflag, size = 0x8, scoped, tag = 'scoped memory for tpu_custom_call.1']
    #allocation6 [shape = 's32[2]{0}', space=sflag, size = 0x8, scoped, tag = 'scoped memory for tpu_custom_call.1']
    #allocation7 [shape = 'u8[512]{0}', space=smem, size = 0x200, scoped, tag = 'input window, operand 1, single buffered']
    #allocation8 [shape = 'u8[2048]{0}', space=vmem, size = 0x800, scoped, tag = 'input window, operand 2']
    #allocation9 [shape = 'u8[2048]{0}', space=vmem, size = 0x800, scoped, tag = 'output window, operand 0']
    %8 = vsyncpa [#allocation5], 0
    %9 = vsyncpa [#allocation6], 0
    %10 = vsyncpa [#allocation3], 0
    %s11 = scalar_lea.sflag [#allocation3], 1
    %12 = vsyncpa %s11, 0
    %13 = vsyncpa [#allocation4], 0
    %s14 = scalar_lea.sflag [#allocation4], 1
    %15 = vsyncpa %s14, 0
    loop: start=0, step=1, limit=8
    $region2: #{tpu_custom_call.1} parent=1 // loop_pre_header
      _
    $region3: #{tpu_custom_call.1} parent=1 // loop_header
      %s17 = sphi 0, %s21
      %p18 = scmp.ge.s32.totalorder %s17, 8
      %s24 = sphi 0, %s43
      %s25 = sphi 0, %s39
      %s26 = sphi 0, %s35
      %s27 = sphi 0, %s24
      %s28 = sphi 0, %s25
      %s29 = sphi 0, %s26
      %s30 = sphi 0, %s27
      %s31 = sphi 0, %s28
      %s32 = sphi 0, %s29
      %s44 = sphi 0, %s44
      %s46 = sphi 0, %s44
      %s47 = sphi 0, %s46
      %s61 = sphi 0, %s47
      %s65 = sphi 0, %s65
      %s67 = sphi 0, %s65
      %s68 = sphi 0, %s67
      %s82 = sphi 0, %s68
      %s92 = sphi 0, %s94
      %s95 = sphi 0, %s92
      %s96 = sphi 0, %s95
      %s112 = sphi 0, %s96
      %s122 = sphi 0, %s124
      %s125 = sphi 0, %s122
      %s126 = sphi 0, %s125
      %s142 = sphi 0, %s126
    $region4: #{tpu_custom_call.1} parent=1 // loop_header_branch
      %20 = sbr.rel (%p18) target = $region8
    $region5: #{tpu_custom_call.1} parent=1 // loop_body
      %s22 = ssub.s32 %s17, 1
      %s23 = ssub.s32 %s17, 2
      %s33 = sadd.s32 1, %s26
      %p34 = scmp.ge.s32.totalorder %s33, 1
      %s35 = scalar_select %p34, 0, %s33
      %s36 = sadd.s32 1, %s25
      %s37 = scalar_select %p34, %s36, %s25
      %p38 = scmp.ge.s32.totalorder %s37, 3
      %s39 = scalar_select %p38, 0, %s37
      %s40 = sadd.s32 1, %s24
      %s41 = scalar_select %p38, %s40, %s24
      %p42 = scmp.ge.s32.totalorder %s41, 2
      %s43 = scalar_select %p42, 0, %s41
      %s45 = sadd.s32 %s44, 1
      %p48 = scmp.eq.s32.totalorder %s17, 5
      %p49 = scmp.ne.s32.totalorder %s44, %s46
      %p50 = scmp.eq.s32.totalorder %s17, 0
      %p51 = por %p49, %p50
      %p52 = scmp.ne.s32.totalorder %s44, %s46
      %p53 = scmp.eq.s32.totalorder %s22, 5
      %p54 = por %p52, %p53
      %p55 = scmp.ne.s32.totalorder %s46, %s47
      %p56 = scmp.eq.s32.totalorder %s22, 0
      %p57 = por %p55, %p56
      %p58 = scmp.ne.s32.totalorder %s46, %s47
      %p59 = scmp.eq.s32.totalorder %s23, 5
      %p60 = por %p58, %p59
      %p62 = scmp.ne.s32.totalorder %s47, %s61
      %p63 = scmp.eq.s32.totalorder %s23, 0
      %p64 = por %p62, %p63
      %s66 = sadd.s32 %s65, 1
      %p69 = scmp.eq.s32.totalorder %s17, 5
      %p70 = scmp.ne.s32.totalorder %s65, %s67
      %p71 = scmp.eq.s32.totalorder %s17, 0
      %p72 = por %p70, %p71
      %p73 = scmp.ne.s32.totalorder %s65, %s67
      %p74 = scmp.eq.s32.totalorder %s22, 5
      %p75 = por %p73, %p74
      %p76 = scmp.ne.s32.totalorder %s67, %s68
      %p77 = scmp.eq.s32.totalorder %s22, 0
      %p78 = por %p76, %p77
      %p79 = scmp.ne.s32.totalorder %s67, %s68
      %p80 = scmp.eq.s32.totalorder %s23, 5
      %p81 = por %p79, %p80
      %p83 = scmp.ne.s32.totalorder %s68, %s82
      %p84 = scmp.eq.s32.totalorder %s23, 0
      %p85 = por %p83, %p84
      %s86 = ssub.s32 %s24, %s43
      %s87 = ssub.s32 %s25, %s39
      %s88 = sor.u32 %s86, %s87
      %s89 = ssub.s32 %s26, %s35
      %s90 = sor.u32 %s88, %s89
      %p91 = scmp.eq.s32.totalorder %s90, 0
      %s93 = sadd.s32 %s92, 1
      %s94 = scalar_select %p91, %s92, %s93
      %p97 = pneg %p91
      %p98 = scmp.eq.s32.totalorder %s17, 5
      %p99 = por %p97, %p98
      %p100 = scmp.ne.s32.totalorder %s92, %s95
      %p101 = scmp.eq.s32.totalorder %s17, 0
      %p102 = por %p100, %p101
      %p103 = scmp.ne.s32.totalorder %s92, %s95
      %p104 = scmp.eq.s32.totalorder %s22, 5
      %p105 = por %p103, %p104
      %p106 = scmp.ne.s32.totalorder %s95, %s96
      %p107 = scmp.eq.s32.totalorder %s22, 0
      %p108 = por %p106, %p107
      %p109 = scmp.ne.s32.totalorder %s95, %s96
      %p110 = scmp.eq.s32.totalorder %s23, 5
      %p111 = por %p109, %p110
      %p113 = scmp.ne.s32.totalorder %s96, %s112
      %p114 = scmp.eq.s32.totalorder %s23, 0
      %p115 = por %p113, %p114
      %s116 = ssub.s32 %s24, %s43
      %s117 = ssub.s32 %s25, %s39
      %s118 = sor.u32 %s116, %s117
      %s119 = ssub.s32 %s26, %s35
      %s120 = sor.u32 %s118, %s119
      %p121 = scmp.eq.s32.totalorder %s120, 0
      %s123 = sadd.s32 %s122, 1
      %s124 = scalar_select %p121, %s122, %s123
      %p127 = pneg %p121
      %p128 = scmp.eq.s32.totalorder %s17, 5
      %p129 = por %p127, %p128
      %p130 = scmp.ne.s32.totalorder %s122, %s125
      %p131 = scmp.eq.s32.totalorder %s17, 0
      %p132 = por %p130, %p131
      %p133 = scmp.ne.s32.totalorder %s122, %s125
      %p134 = scmp.eq.s32.totalorder %s22, 5
      %p135 = por %p133, %p134
      %p136 = scmp.ne.s32.totalorder %s125, %s126
      %p137 = scmp.eq.s32.totalorder %s22, 0
      %p138 = por %p136, %p137
      %p139 = scmp.ne.s32.totalorder %s125, %s126
      %p140 = scmp.eq.s32.totalorder %s23, 5
      %p141 = por %p139, %p140
      %p143 = scmp.ne.s32.totalorder %s126, %s142
      %p144 = scmp.eq.s32.totalorder %s23, 0
      %p145 = por %p143, %p144
      %p146 = scmp.le.s32.totalorder 1, %s17
      %p147 = scmp.lt.s32.totalorder %s17, 7
      %p148 = pnand %p146, %p147
      %p149 = pneg %p148
      // Predicated region
      $region9: #{tpu_custom_call.1} parent=5 // pred_check
        _
      $region10: #{tpu_custom_call.1} parent=5 // pred_check_branch
        %151 = sbr.rel (%p148) target = $region12
      $region11: #{tpu_custom_call.1} parent=5 // pred_region
        %s152 = ssub.s32 %s17, 1
        // Predicated region
        $region13: #{tpu_custom_call.1} parent=11 // pred_check
          %p153 = pneg %p57
        $region14: #{tpu_custom_call.1} parent=11 // pred_check_branch
          %155 = sbr.rel (%p153) target = $region16
        $region15: #{tpu_custom_call.1} parent=11 // pred_region
          %s157 = ssub.s32 16, 16
          %158 = vsyncadd [#allocation5], %s157
          %161 = dma.hbm_to_smem %s0, 16, [#allocation2], [#allocation5]
        $region16: #{tpu_custom_call.1} parent=11 // pred_fallthru
          _
        // Predicated region
        $region17: #{tpu_custom_call.1} parent=11 // pred_check
          %p162 = pneg %p78
        $region18: #{tpu_custom_call.1} parent=11 // pred_check_branch
          %164 = sbr.rel (%p162) target = $region20
        $region19: #{tpu_custom_call.1} parent=11 // pred_region
          %s166 = ssub.s32 16, 16
          %167 = vsyncadd [#allocation6], %s166
          %s169 = sshll.u32 %s1, 4
          %s170 = int_to_ptr.vmem [resolvable:$true] %s169
          %172 = dma.vmem_to_smem %s170, 16, [#allocation7], [#allocation6]
        $region20: #{tpu_custom_call.1} parent=11 // pred_fallthru
          _
      $region12: #{tpu_custom_call.1} parent=5 // pred_fallthru
        _
      %p173 = scmp.lt.s32.totalorder %s17, 6
      // Predicated region
      $region21: #{tpu_custom_call.1} parent=5 // pred_check
        %p174 = pneg %p173
      $region22: #{tpu_custom_call.1} parent=5 // pred_check_branch
        %176 = sbr.rel (%p174) target = $region24
      $region23: #{tpu_custom_call.1} parent=5 // pred_region
        // Predicated region
        $region25: #{tpu_custom_call.1} parent=23 // pred_check
          %p177 = pneg %p102
        $region26: #{tpu_custom_call.1} parent=23 // pred_check_branch
          %179 = sbr.rel (%p177) target = $region28
        $region27: #{tpu_custom_call.1} parent=23 // pred_region
          %s180 = sand.u32 %s92, 1
          %s181 = scalar_lea.sflag [#allocation3], %s180
          %s182 = sand.u32 %s92, 1
          %s183 = smul.addr %s182, 2
          %s184 = scalar_lea.vmem [#allocation8], %s183
          %s186 = ssub.s32 32, 32
          %187 = vsyncadd %s181, %s186
          %s188 = sadd.s32 %s26, %s25
          %s189 = smul.addr %s24, 3
          %s190 = sadd.s32 %s188, %s189
          %s191 = smul.addr %s190, 32
          %s192 = scalar_lea.hbm %s2, %s191
          %s194 = sshll.u32 %s184, 4
          %s195 = int_to_ptr.vmem [resolvable:$true] %s194
          %197 = dma.hbm_to_vmem [thread:$0]  %s192, 32, %s195, %s181
        $region28: #{tpu_custom_call.1} parent=23 // pred_fallthru
          _
      $region24: #{tpu_custom_call.1} parent=5 // pred_fallthru
        _
      %p198 = scmp.le.s32.totalorder 1, %s17
      %p199 = scmp.lt.s32.totalorder %s17, 7
      %p200 = pnand %p198, %p199
      %p201 = pneg %p200
      // Predicated region
      $region29: #{tpu_custom_call.1} parent=5 // pred_check
        _
      $region30: #{tpu_custom_call.1} parent=5 // pred_check_branch
        %203 = sbr.rel (%p200) target = $region32
      $region31: #{tpu_custom_call.1} parent=5 // pred_region
        %s204 = ssub.s32 %s17, 1
        // Predicated region
        $region33: #{tpu_custom_call.1} parent=31 // pred_check
          %p205 = pneg %p57
        $region34: #{tpu_custom_call.1} parent=31 // pred_check_branch
          %207 = sbr.rel (%p205) target = $region36
        $region35: #{tpu_custom_call.1} parent=31 // pred_region
          %208 = dma.done [#allocation5], 16
        $region36: #{tpu_custom_call.1} parent=31 // pred_fallthru
          _
        // Predicated region
        $region37: #{tpu_custom_call.1} parent=31 // pred_check
          %p209 = pneg %p78
        $region38: #{tpu_custom_call.1} parent=31 // pred_check_branch
          %211 = sbr.rel (%p209) target = $region40
        $region39: #{tpu_custom_call.1} parent=31 // pred_region
          %212 = dma.done [#allocation6], 16
        $region40: #{tpu_custom_call.1} parent=31 // pred_fallthru
          _
        %s213 = sand.u32 %s95, 1
        %s214 = scalar_lea.sflag [#allocation3], %s213
        %s215 = sand.u32 %s95, 1
        %s216 = smul.addr %s215, 2
        %s217 = scalar_lea.vmem [#allocation8], %s216
        // Predicated region
        $region41: #{tpu_custom_call.1} parent=31 // pred_check
          %p218 = pneg %p108
        $region42: #{tpu_custom_call.1} parent=31 // pred_check_branch
          %220 = sbr.rel (%p218) target = $region44
        $region43: #{tpu_custom_call.1} parent=31 // pred_region
          %221 = dma.done %s214, 32
        $region44: #{tpu_custom_call.1} parent=31 // pred_fallthru
          _
        %222 = sfence
        %p223 = pneg %p57
        %p224 = pneg %p54
        %p225 = pneg %p78
        %p226 = pneg %p75
        %s227 = sand.u32 %s95, 1
        %s228 = scalar_lea.sflag [#allocation3], %s227
        %s229 = sand.u32 %s95, 1
        %s230 = smul.addr %s229, 2
        %s231 = scalar_lea.vmem [#allocation8], %s230
        %p232 = pneg %p108
        %p233 = pneg %p105
        %p234 = pneg %p138
        %p235 = pneg %p135
        %s236 = sand.u32 %s125, 1
        %s237 = scalar_lea.sflag [#allocation4], %s236
        %s238 = sand.u32 %s125, 1
        %s239 = smul.addr %s238, 2
        %s240 = scalar_lea.vmem [#allocation9], %s239
        %s241 = sld [smem:[#allocation2 + %s28]]
        %s242 = sld [smem:[#allocation7 + %s28]]
        %v243 = vld [vmem:[%s217] sm:$0x3]
        %v244 = vstv %s241
        %v245 = vmul.f32 %v243, %v244
        %v246 = vstv %s242
        %v247 = vadd.f32 %v245, %v246
        %248 = vst [vmem:[%s240] sm:$0x3] %v247
        %s249 = sand.u32 %s125, 1
        %s250 = scalar_lea.sflag [#allocation4], %s249
        %s251 = sand.u32 %s125, 1
        %s252 = smul.addr %s251, 2
        %s253 = scalar_lea.vmem [#allocation9], %s252
        // Predicated region
        $region45: #{tpu_custom_call.1} parent=31 // pred_check
          %p254 = pneg %p135
        $region46: #{tpu_custom_call.1} parent=31 // pred_check_branch
          %256 = sbr.rel (%p254) target = $region48
        $region47: #{tpu_custom_call.1} parent=31 // pred_region
          %s258 = ssub.s32 32, 32
          %259 = vsyncadd %s250, %s258
          %s260 = sadd.s32 %s29, %s28
          %s261 = smul.addr %s27, 3
          %s262 = sadd.s32 %s260, %s261
          %s263 = smul.addr %s262, 32
          %s264 = scalar_lea.hbm %s3, %s263
          %s266 = sshll.u32 %s253, 4
          %s267 = int_to_ptr.vmem [resolvable:$true] %s266
          %269 = dma.vmem_to_hbm [thread:$0]  %s267, 32, %s264, %s250
        $region48: #{tpu_custom_call.1} parent=31 // pred_fallthru
          _
      $region32: #{tpu_custom_call.1} parent=5 // pred_fallthru
        _
      %p270 = scmp.le.s32.totalorder 2, %s17
      // Predicated region
      $region49: #{tpu_custom_call.1} parent=5 // pred_check
        %p271 = pneg %p270
      $region50: #{tpu_custom_call.1} parent=5 // pred_check_branch
        %273 = sbr.rel (%p271) target = $region52
      $region51: #{tpu_custom_call.1} parent=5 // pred_region
        %s274 = ssub.s32 %s17, 2
        // Predicated region
        $region53: #{tpu_custom_call.1} parent=51 // pred_check
          %p275 = pneg %p141
        $region54: #{tpu_custom_call.1} parent=51 // pred_check_branch
          %277 = sbr.rel (%p275) target = $region56
        $region55: #{tpu_custom_call.1} parent=51 // pred_region
          %s278 = sand.u32 %s126, 1
          %s279 = scalar_lea.sflag [#allocation4], %s278
          %s280 = sand.u32 %s126, 1
          %s281 = smul.addr %s280, 2
          %s282 = scalar_lea.vmem [#allocation9], %s281
          %283 = dma.done %s279, 32
        $region56: #{tpu_custom_call.1} parent=51 // pred_fallthru
          _
      $region52: #{tpu_custom_call.1} parent=5 // pred_fallthru
        _
    $region6: #{tpu_custom_call.1} parent=1 // loop_footer
      %s21 = sadd.s32 1, %s17
    $region7: #{tpu_custom_call.1} parent=1 // loop_footer_branch
      %16 = sbr.rel target = $region3
    $region8: #{tpu_custom_call.1} parent=1 // loop_exit
      _
    %284 = vsyncpa [#allocation3], 1
    %s285 = scalar_lea.sflag [#allocation3], 1
    %286 = vsyncpa %s285, 1
    %287 = vsyncpa [#allocation4], 1
    %s288 = scalar_lea.sflag [#allocation4], 1
    %289 = vsyncpa %s288, 1
    %290 = vsyncpa [#allocation5], 1
    %s291 = scalar_lea.sflag [#allocation5], 1
    %292 = vsyncpa %s291, 1
    %293 = vsyncpa [#allocation6], 1
    %s294 = scalar_lea.sflag [#allocation6], 1
    %295 = vsyncpa %s294, 1

</llo_original>
